<compile_context>
chip_gen: v7x
topology: tpu7x:2x2x1
jax: 0.10.0
libtpu: 0.0.40
codegen_flags: <defaults>
</compile_context>

<pallas_src>
import functools

import jax
import jax.numpy as jnp
from jax.experimental import pallas as pl
from jax.experimental.pallas import tpu as pltpu

_OUT_PAD = 8  # pad the (n_waypoints*2)=6 output features to one sublane row


def _round_up(x, m):
    return ((x + m - 1) // m) * m


def _mlp_kernel(x_ref, w1_ref, w2_ref, w3_ref, w4_ref, b123_ref, b4_ref, out_ref):
    b123 = b123_ref[...]                       # read once, slice as values
    h = jnp.dot(x_ref[...], w1_ref[...],
                preferred_element_type=jnp.float32) + b123[0:1, :]
    h = jnp.maximum(h, 0.0)
    h = jnp.dot(h, w2_ref[...],
                preferred_element_type=jnp.float32) + b123[1:2, :]
    h = jnp.maximum(h, 0.0)
    h = jnp.dot(h, w3_ref[...],
                preferred_element_type=jnp.float32) + b123[2:3, :]
    h = jnp.maximum(h, 0.0)
    out = jnp.dot(h, w4_ref[...],
                  preferred_element_type=jnp.float32) + b4_ref[...]
    out_ref[...] = out.astype(out_ref.dtype)


def prepare_kernel_params(params, n_track=10):
    """One-time repack of nn.Linear-style params into the kernel layout."""
    w1, b1, w2, b2, w3, b3, w4, b4 = params
    out_dim = w4.shape[1]
    pad_out = max(_OUT_PAD, _round_up(out_dim, _OUT_PAD))
    w4p = jnp.pad(w4, ((0, 0), (0, pad_out - out_dim)))
    b4p = jnp.pad(b4.reshape(1, -1), ((0, 0), (0, pad_out - out_dim)))
    b123 = jnp.concatenate(
        [b1.reshape(1, -1), b2.reshape(1, -1), b3.reshape(1, -1)], axis=0)
    return (w1, w2, w3, w4p, b123, b4p)


@functools.partial(jax.jit, static_argnames=("n_waypoints",))
def mlp_planner_forward(track_left, track_right, kparams, n_waypoints=3):
    """track_left, track_right: (b, n_track, 2) -> waypoints (b, n_waypoints, 2)."""
    w1, w2, w3, w4p, b123, b4p = kparams
    b, n_track, _ = track_left.shape
    feat = 4 * n_track
    hidden = w2.shape[0]
    pad_out = w4p.shape[1]
    out_dim = n_waypoints * 2

    # torch.cat([left, right], dim=1).view(b, -1)
    #   == concat([left.reshape(b, 2n), right.reshape(b, 2n)], axis=-1)
    x = jnp.concatenate(
        [track_left.reshape(b, 2 * n_track), track_right.reshape(b, 2 * n_track)],
        axis=-1).astype(jnp.float32)

    # Tile selection:
    #  * b <= 128: one tile (overhead-minimal).
    #  * 128 < b <= 4096: exactly 2 parallel tiles -> both v7x TensorCores.
    #  * b > 4096: 2048-row tiles (per-step fixed cost dominates; fewer,
    #    larger steps win; VMEM use is still < 1 MiB per buffer).
    if b <= 128:
        tile_b = max(8, _round_up(b, 8))
    elif b <= 4096:
        tile_b = _round_up(pl.cdiv(b, 2), 8)
    else:
        tile_b = 2048
    b_pad = _round_up(b, tile_b)
    if b_pad != b:
        x = jnp.pad(x, ((0, b_pad - b), (0, 0)))

    grid = (b_pad // tile_b,)
    const = lambda i: (0, 0)

    flops = 2 * b_pad * (feat * hidden + 2 * hidden * hidden + hidden * pad_out)
    bytes_accessed = 4 * (b_pad * (feat + pad_out)
                          + feat * hidden + 2 * hidden * hidden
                          + hidden * pad_out + 3 * hidden + pad_out)

    out = pl.pallas_call(
        _mlp_kernel,
        out_shape=jax.ShapeDtypeStruct((b_pad, pad_out), jnp.float32),
        grid_spec=pltpu.PrefetchScalarGridSpec(
            num_scalar_prefetch=0,
            grid=grid,
            in_specs=[
                pl.BlockSpec((tile_b, feat), lambda i: (i, 0)),   # x
                pl.BlockSpec((feat, hidden), const),              # w1
                pl.BlockSpec((hidden, hidden), const),            # w2
                pl.BlockSpec((hidden, hidden), const),            # w3
                pl.BlockSpec((hidden, pad_out), const),           # w4 (8-lane pad)
                pl.BlockSpec((3, hidden), const),                 # b1/b2/b3 stacked
                pl.BlockSpec((1, pad_out), const),                # b4 (8-lane pad)
            ],
            out_specs=pl.BlockSpec((tile_b, pad_out), lambda i: (i, 0)),
        ),
        compiler_params=pltpu.CompilerParams(
            dimension_semantics=("parallel",)),
        cost_estimate=pl.CostEstimate(flops=flops, transcendentals=0,
                                      bytes_accessed=bytes_accessed),
    )(x, w1, w2, w3, w4p, b123, b4p)

    return out[:b, :out_dim].reshape(b, n_waypoints, 2)


def init_params(key, n_track=10, n_waypoints=3, hidden_dim=128):
    """Deterministic init mimicking nn.Linear's U(-1/sqrt(fan_in), 1/sqrt(fan_in))."""
    input_dim = 4 * n_track
    output_dim = n_waypoints * 2
    dims = [(input_dim, hidden_dim), (hidden_dim, hidden_dim),
            (hidden_dim, hidden_dim), (hidden_dim, output_dim)]
    params = []
    keys = jax.random.split(key, 2 * len(dims))
    for i, (fan_in, fan_out) in enumerate(dims):
        bound = 1.0 / jnp.sqrt(fan_in)
        w = jax.random.uniform(keys[2 * i], (fan_in, fan_out),
                               minval=-bound, maxval=bound, dtype=jnp.float32)
        bb = jax.random.uniform(keys[2 * i + 1], (1, fan_out),
                                minval=-bound, maxval=bound, dtype=jnp.float32)
        params += [w, bb]
    return tuple(params)


def _reference_forward(track_left, track_right, params, n_waypoints=3):
    b = track_left.shape[0]
    x = jnp.concatenate([track_left, track_right], axis=1).reshape(b, -1)
    w1, b1, w2, b2, w3, b3, w4, b4 = params
    h = jnp.maximum(x @ w1 + b1, 0.0)
    h = jnp.maximum(h @ w2 + b2, 0.0)
    h = jnp.maximum(h @ w3 + b3, 0.0)
    out = h @ w4 + b4
    return out.reshape(b, n_waypoints, 2)


if __name__ == "__main__":
    n_track, n_waypoints, hidden_dim = 10, 3, 128

    key = jax.random.PRNGKey(0)
    k_params, k_left, k_right = jax.random.split(key, 3)

    params = init_params(k_params, n_track, n_waypoints, hidden_dim)
    kparams = prepare_kernel_params(params, n_track)

    ok = True
    # batch=2 exercises the single-tile path; batch=260 exercises the
    # 2-step parallel grid (v7x dual-TC) path.
    for batch in (2, 260):
        kl, kr = jax.random.split(jax.random.fold_in(k_left, batch), 2)
        track_left = jax.random.normal(kl, (batch, n_track, 2), dtype=jnp.float32)
        track_right = jax.random.normal(kr, (batch, n_track, 2), dtype=jnp.float32)

        out = mlp_planner_forward(track_left, track_right, kparams,
                                  n_waypoints=n_waypoints)
        out = jax.block_until_ready(out)

        ref = _reference_forward(track_left, track_right, params, n_waypoints)
        assert out.shape == (batch, n_waypoints, 2), out.shape
        ok &= bool(jnp.allclose(out, ref, atol=1e-4, rtol=1e-4))

    assert ok, "mismatch vs JAX reference"
    print("KERNEL_OK")
</pallas_src>

<mosaic_0001>
module attributes {stable_mosaic.version = 11 : i64} {
  func.func @_mlp_kernel(%arg0: i32, %arg1: memref<8x40xf32, #tpu.memory_space<vmem>>, %arg2: memref<40x128xf32, #tpu.memory_space<vmem>>, %arg3: memref<128x128xf32, #tpu.memory_space<vmem>>, %arg4: memref<128x128xf32, #tpu.memory_space<vmem>>, %arg5: memref<128x8xf32, #tpu.memory_space<vmem>>, %arg6: memref<3x128xf32, #tpu.memory_space<vmem>>, %arg7: memref<1x8xf32, #tpu.memory_space<vmem>>, %arg8: memref<8x8xf32, #tpu.memory_space<vmem>>) attributes {dimension_semantics = [#tpu.dimension_semantics<parallel>], iteration_bounds = array<i64: 1>, scalar_prefetch = 0 : i64, scratch_operands = 0 : i64, tpu.core_type = #tpu.core_type<tc>, window_params = [{transform_indices = @transform_0, window_bounds = array<i64: 8, 40>}, {pipeline_mode = #tpu.pipeline_mode<synchronous>, transform_indices = @transform_1, window_bounds = array<i64: 40, 128>}, {pipeline_mode = #tpu.pipeline_mode<synchronous>, transform_indices = @transform_2, window_bounds = array<i64: 128, 128>}, {pipeline_mode = #tpu.pipeline_mode<synchronous>, transform_indices = @transform_3, window_bounds = array<i64: 128, 128>}, {pipeline_mode = #tpu.pipeline_mode<synchronous>, transform_indices = @transform_4, window_bounds = array<i64: 128, 8>}, {pipeline_mode = #tpu.pipeline_mode<synchronous>, transform_indices = @transform_5, window_bounds = array<i64: 3, 128>}, {pipeline_mode = #tpu.pipeline_mode<synchronous>, transform_indices = @transform_6, window_bounds = array<i64: 1, 8>}, {transform_indices = @transform_7, window_bounds = array<i64: 8, 8>}]} {
    %c0 = arith.constant 0 : index
    %c0_0 = arith.constant 0 : index
    %0 = vector.load %arg6[%c0, %c0_0] : memref<3x128xf32, #tpu.memory_space<vmem>>, vector<3x128xf32>
    %c0_1 = arith.constant 0 : index
    %c0_2 = arith.constant 0 : index
    %1 = vector.load %arg1[%c0_1, %c0_2] : memref<8x40xf32, #tpu.memory_space<vmem>>, vector<8x40xf32>
    %c0_3 = arith.constant 0 : index
    %c0_4 = arith.constant 0 : index
    %2 = vector.load %arg2[%c0_3, %c0_4] : memref<40x128xf32, #tpu.memory_space<vmem>>, vector<40x128xf32>
    %cst = arith.constant dense<0.000000e+00> : vector<8x128xf32>
    %3 = tpu.matmul %1, %2, %cst {dimension_numbers = #tpu.dot_dimension_numbers<[1], [0], [0], [1], [0, 0, 1, 1], [], []>} : vector<8x40xf32>, vector<40x128xf32>, vector<8x128xf32> -> vector<8x128xf32>
    %4 = vector.extract_strided_slice %0 {offsets = [0, 0], sizes = [1, 128], strides = [1, 1]} : vector<3x128xf32> to vector<1x128xf32>
    %5 = vector.broadcast %4 : vector<1x128xf32> to vector<8x128xf32>
    %6 = arith.addf %3, %5 : vector<8x128xf32>
    %cst_5 = arith.constant 0.000000e+00 : f32
    %7 = vector.broadcast %cst_5 : f32 to vector<8x128xf32>
    %8 = arith.maximumf %6, %7 : vector<8x128xf32>
    %c0_6 = arith.constant 0 : index
    %c0_7 = arith.constant 0 : index
    %9 = vector.load %arg3[%c0_6, %c0_7] : memref<128x128xf32, #tpu.memory_space<vmem>>, vector<128x128xf32>
    %cst_8 = arith.constant dense<0.000000e+00> : vector<8x128xf32>
    %10 = tpu.matmul %8, %9, %cst_8 {dimension_numbers = #tpu.dot_dimension_numbers<[1], [0], [0], [1], [0, 0, 1, 1], [], []>} : vector<8x128xf32>, vector<128x128xf32>, vector<8x128xf32> -> vector<8x128xf32>
    %11 = vector.extract_strided_slice %0 {offsets = [1, 0], sizes = [1, 128], strides = [1, 1]} : vector<3x128xf32> to vector<1x128xf32>
    %12 = vector.broadcast %11 : vector<1x128xf32> to vector<8x128xf32>
    %13 = arith.addf %10, %12 : vector<8x128xf32>
    %cst_9 = arith.constant 0.000000e+00 : f32
    %14 = vector.broadcast %cst_9 : f32 to vector<8x128xf32>
    %15 = arith.maximumf %13, %14 : vector<8x128xf32>
    %c0_10 = arith.constant 0 : index
    %c0_11 = arith.constant 0 : index
    %16 = vector.load %arg4[%c0_10, %c0_11] : memref<128x128xf32, #tpu.memory_space<vmem>>, vector<128x128xf32>
    %cst_12 = arith.constant dense<0.000000e+00> : vector<8x128xf32>
    %17 = tpu.matmul %15, %16, %cst_12 {dimension_numbers = #tpu.dot_dimension_numbers<[1], [0], [0], [1], [0, 0, 1, 1], [], []>} : vector<8x128xf32>, vector<128x128xf32>, vector<8x128xf32> -> vector<8x128xf32>
    %18 = vector.extract_strided_slice %0 {offsets = [2, 0], sizes = [1, 128], strides = [1, 1]} : vector<3x128xf32> to vector<1x128xf32>
    %19 = vector.broadcast %18 : vector<1x128xf32> to vector<8x128xf32>
    %20 = arith.addf %17, %19 : vector<8x128xf32>
    %cst_13 = arith.constant 0.000000e+00 : f32
    %21 = vector.broadcast %cst_13 : f32 to vector<8x128xf32>
    %22 = arith.maximumf %20, %21 : vector<8x128xf32>
    %c0_14 = arith.constant 0 : index
    %c0_15 = arith.constant 0 : index
    %23 = vector.load %arg5[%c0_14, %c0_15] : memref<128x8xf32, #tpu.memory_space<vmem>>, vector<128x8xf32>
    %cst_16 = arith.constant dense<0.000000e+00> : vector<8x8xf32>
    %24 = tpu.matmul %22, %23, %cst_16 {dimension_numbers = #tpu.dot_dimension_numbers<[1], [0], [0], [1], [0, 0, 1, 1], [], []>} : vector<8x128xf32>, vector<128x8xf32>, vector<8x8xf32> -> vector<8x8xf32>
    %c0_17 = arith.constant 0 : index
    %c0_18 = arith.constant 0 : index
    %25 = vector.load %arg7[%c0_17, %c0_18] : memref<1x8xf32, #tpu.memory_space<vmem>>, vector<1x8xf32>
    %26 = vector.broadcast %25 : vector<1x8xf32> to vector<8x8xf32>
    %27 = arith.addf %24, %26 : vector<8x8xf32>
    %c0_19 = arith.constant 0 : index
    %c0_20 = arith.constant 0 : index
    %28 = vector.load %arg8[%c0_19, %c0_20] : memref<8x8xf32, #tpu.memory_space<vmem>>, vector<8x8xf32>
    tpu.vector_store %arg8[%c0_19, %c0_20], %27 {strides = array<i32>} : memref<8x8xf32, #tpu.memory_space<vmem>>, vector<8x8xf32>,
    return
  }
  func.func @transform_0(%arg0: i32) -> (i32, i32) {
    %c0_i32 = arith.constant 0 : i32
    %c0_i32_0 = arith.constant 0 : i32
    return %arg0, %c0_i32 : i32, i32
  }
  func.func @transform_1(%arg0: i32) -> (i32, i32) {
    %c0_i32 = arith.constant 0 : i32
    %c0_i32_0 = arith.constant 0 : i32
    %c0_i32_1 = arith.constant 0 : i32
    return %c0_i32, %c0_i32_0 : i32, i32
  }
  func.func @transform_2(%arg0: i32) -> (i32, i32) {
    %c0_i32 = arith.constant 0 : i32
    %c0_i32_0 = arith.constant 0 : i32
    %c0_i32_1 = arith.constant 0 : i32
    return %c0_i32, %c0_i32_0 : i32, i32
  }
  func.func @transform_3(%arg0: i32) -> (i32, i32) {
    %c0_i32 = arith.constant 0 : i32
    %c0_i32_0 = arith.constant 0 : i32
    %c0_i32_1 = arith.constant 0 : i32
    return %c0_i32, %c0_i32_0 : i32, i32
  }
  func.func @transform_4(%arg0: i32) -> (i32, i32) {
    %c0_i32 = arith.constant 0 : i32
    %c0_i32_0 = arith.constant 0 : i32
    %c0_i32_1 = arith.constant 0 : i32
    return %c0_i32, %c0_i32_0 : i32, i32
  }
  func.func @transform_5(%arg0: i32) -> (i32, i32) {
    %c0_i32 = arith.constant 0 : i32
    %c0_i32_0 = arith.constant 0 : i32
    %c0_i32_1 = arith.constant 0 : i32
    return %c0_i32, %c0_i32_0 : i32, i32
  }
  func.func @transform_6(%arg0: i32) -> (i32, i32) {
    %c0_i32 = arith.constant 0 : i32
    %c0_i32_0 = arith.constant 0 : i32
    %c0_i32_1 = arith.constant 0 : i32
    return %c0_i32, %c0_i32_0 : i32, i32
  }
  func.func @transform_7(%arg0: i32) -> (i32, i32) {
    %c0_i32 = arith.constant 0 : i32
    %c0_i32_0 = arith.constant 0 : i32
    return %arg0, %c0_i32 : i32, i32
  }
}

</mosaic_0001>

<llo_original>
// kernel: mlp_planner_forward.1
$region0: #{mlp_planner_forward.1}
  #allocation0 [shape = 'u32[]', space=smem, size = 0x4, offset = 0x4, fixed_abs, tag = 'smem constant byte address 0x4 - core index']
  #allocation1 [shape = 'u32[144,128]{1,0:T(1,128)}', space=vmem, size = 0x12000, scoped, tag = 'internal scratch']
  %s0 = inlined_call_operand.vmem [shape: f32[8,40], index: 0, kind: input, shape index: {}]
  %s1 = inlined_call_operand.hbm [shape: f32[40,128], index: 1, kind: input, shape index: {}]
  %s2 = inlined_call_operand.vmem [shape: f32[128,128], index: 2, kind: input, shape index: {}]
  %s3 = inlined_call_operand.vmem [shape: f32[128,128], index: 3, kind: input, shape index: {}]
  %s4 = inlined_call_operand.vmem [shape: f32[128,8], index: 4, kind: input, shape index: {}]
  %s5 = inlined_call_operand.vmem [shape: f32[3,128], index: 5, kind: input, shape index: {}]
  %s6 = inlined_call_operand.vmem [shape: f32[1,8], index: 6, kind: input, shape index: {}]
  %s7 = inlined_call_operand.vmem [shape: f32[8,8], index: 7, kind: output, shape index: {}]
  %s8 = sld [smem:[#allocation0]]
  $region42: #{mlp_planner_forward.1} parent=0
    _
  %s10 = ssub.s32 1, %s8
  %s11 = scalar_select 0, %s10, %s8
  $region1: #{mlp_planner_forward.1} parent=0
    #allocation2 [shape = 'u8[20480]{0}', space=vmem, size = 0x5000, scoped, tag = 'input window, operand 1, single buffered']
    #allocation3 [shape = 's32[1]{0}', space=sflag, size = 0x4, scoped, tag = 'scoped memory for mlp_planner_forward.1']
    %12 = vsyncpa [#allocation3], 0
    // Predicated region
    $region2: #{mlp_planner_forward.1} parent=1 // pred_check
      _
    $region3: #{mlp_planner_forward.1} parent=1 // pred_check_branch
      %14 = sbr.rel (0) target = $region5
    $region4: #{mlp_planner_forward.1} parent=1 // pred_region
      _
    $region5: #{mlp_planner_forward.1} parent=1 // pred_fallthru
      _
    // Predicated region
    $region6: #{mlp_planner_forward.1} parent=1 // pred_check
      _
    $region7: #{mlp_planner_forward.1} parent=1 // pred_check_branch
      %16 = sbr.rel (0) target = $region9
    $region8: #{mlp_planner_forward.1} parent=1 // pred_region
      %s18 = ssub.s32 640, 640
      %19 = vsyncadd [#allocation3], %s18
      %s20 = sshll.u32 [#allocation2], 4
      %s21 = int_to_ptr.vmem [resolvable:$true] %s20
      %26 = dma.hbm_to_vmem [thread:$0]  %s1, 640, %s21, [#allocation3], 128, 128, 8
    $region9: #{mlp_planner_forward.1} parent=1 // pred_fallthru
      _
    // Predicated region
    $region10: #{mlp_planner_forward.1} parent=1 // pred_check
      _
    $region11: #{mlp_planner_forward.1} parent=1 // pred_check_branch
      %28 = sbr.rel (0) target = $region13
    $region12: #{mlp_planner_forward.1} parent=1 // pred_region
      _
    $region13: #{mlp_planner_forward.1} parent=1 // pred_fallthru
      _
    // Predicated region
    $region14: #{mlp_planner_forward.1} parent=1 // pred_check
      _
    $region15: #{mlp_planner_forward.1} parent=1 // pred_check_branch
      %30 = sbr.rel (0) target = $region17
    $region16: #{mlp_planner_forward.1} parent=1 // pred_region
      _
    $region17: #{mlp_planner_forward.1} parent=1 // pred_fallthru
      _
    // Predicated region
    $region18: #{mlp_planner_forward.1} parent=1 // pred_check
      _
    $region19: #{mlp_planner_forward.1} parent=1 // pred_check_branch
      %32 = sbr.rel (0) target = $region21
    $region20: #{mlp_planner_forward.1} parent=1 // pred_region
      _
    $region21: #{mlp_planner_forward.1} parent=1 // pred_fallthru
      _
    // Predicated region
    $region22: #{mlp_planner_forward.1} parent=1 // pred_check
      _
    $region23: #{mlp_planner_forward.1} parent=1 // pred_check_branch
      %34 = sbr.rel (0) target = $region25
    $region24: #{mlp_planner_forward.1} parent=1 // pred_region
      _
    $region25: #{mlp_planner_forward.1} parent=1 // pred_fallthru
      _
    // Predicated region
    $region26: #{mlp_planner_forward.1} parent=1 // pred_check
      _
    $region27: #{mlp_planner_forward.1} parent=1 // pred_check_branch
      %36 = sbr.rel (0) target = $region29
    $region28: #{mlp_planner_forward.1} parent=1 // pred_region
      _
    $region29: #{mlp_planner_forward.1} parent=1 // pred_fallthru
      _
    // Predicated region
    $region30: #{mlp_planner_forward.1} parent=1 // pred_check
      _
    $region31: #{mlp_planner_forward.1} parent=1 // pred_check_branch
      %38 = sbr.rel (0) target = $region33
    $region32: #{mlp_planner_forward.1} parent=1 // pred_region
      %39 = dma.done [#allocation3], 640
    $region33: #{mlp_planner_forward.1} parent=1 // pred_fallthru
      _
    %v40 = vld [vmem:[%s5] sm:$0x7]
    %v41 = vld [vmem:[%s0] sm:$0xff]
    %v42 = vld [vmem:[#allocation2] sm:$0xff]
    %v43 = vld [vmem:[#allocation2 + $0x8] sm:$0xff]
    %v44 = vld [vmem:[#allocation2 + $0x10] sm:$0xff]
    %v45 = vld [vmem:[#allocation2 + $0x18] sm:$0xff]
    %v46 = vld [vmem:[#allocation2 + $0x20] sm:$0xff]
    %v47 = vlaneseq
    %v48 = vshrl.u32 %v47, 7
    %v49 = vsub.s32 0, %v48
    %v50 = vrot.slane %v40, %v49
    %vm51 = vcmask 326656
    %v53 = vsel %vm51, %v41, 0
    %55 = vmatprep.subr.mxu0 0.0
    %56 = vmatpush1.msra.mxu0 %v42
    %57 = vmatprep.subr.mxu0 0.0
    %58 = vmatpush1.msra.mxu0 %v43
    %59 = vmatprep.subr.mxu0 0.0
    %60 = vmatpush1.msra.mxu0 %v44
    %61 = vmatprep.subr.mxu0 0.0
    %62 = vmatpush1.msra.mxu0 %v45
    %63 = vmatprep.subr.mxu0 0.0
    %64 = vmatpush1.msra.mxu0 %v46
    %65 = vmatprep.subr.mxu0 0.0
    %66 = vmatpush1.msra.mxu0 0.0
    %67 = vmatprep.subr.mxu0 0.0
    %68 = vmatpush1.msra.mxu0 0.0
    %69 = vmatprep.subr.mxu0 0.0
    %70 = vmatpush1.msra.mxu0 0.0
    %71 = vmatprep.subr.mxu0 0.0
    %72 = vmatpush1.msra.mxu0 0.0
    %73 = vmatprep.subr.mxu0 0.0
    %74 = vmatpush1.msra.mxu0 0.0
    %75 = vmatprep.subr.mxu0 0.0
    %76 = vmatpush1.msra.mxu0 0.0
    %77 = vmatprep.subr.mxu0 0.0
    %78 = vmatpush1.msra.mxu0 0.0
    %79 = vmatprep.subr.mxu0 0.0
    %80 = vmatpush1.msra.mxu0 0.0
    %81 = vmatprep.subr.mxu0 0.0
    %82 = vmatpush1.msra.mxu0 0.0
    %83 = vmatprep.subr.mxu0 0.0
    %84 = vmatpush1.msra.mxu0 0.0
    %85 = vmatprep.subr.mxu0 0.0
    %86 = vmatpush1.msra.mxu0 0.0
    %87 = vmatprep.subr.mxu0 0.0
    %88 = vmatpush1.msra.mxu0 0.0
    %89 = vmatprep.subr.mxu0 0.0
    %90 = vmatpush1.msra.mxu0 0.0
    %91 = vmatprep.subr.mxu0 0.0
    %92 = vmatpush1.msra.mxu0 0.0
    %93 = vmatprep.subr.mxu0 0.0
    %94 = vmatpush1.msra.mxu0 0.0
    %95 = vmatprep.subr.mxu0 0.0
    %96 = vmatpush1.msra.mxu0 0.0
    %97 = vmatprep.subr.mxu0 0.0
    %98 = vmatpush1.msra.mxu0 0.0
    %99 = vmatprep.subr.mxu0 0.0
    %100 = vmatpush1.msra.mxu0 0.0
    %101 = vmatprep.subr.mxu0 0.0
    %102 = vmatpush1.msra.mxu0 0.0
    %103 = vmatprep.subr.mxu0 0.0
    %104 = vmatpush1.msra.mxu0 0.0
    %105 = vmatprep.subr.mxu0 0.0
    %106 = vmatpush1.msra.mxu0 0.0
    %107 = vmatprep.subr.mxu0 0.0
    %108 = vmatpush1.msra.mxu0 0.0
    %109 = vmatprep.subr.mxu0 0.0
    %110 = vmatpush1.msra.mxu0 0.0
    %111 = vmatprep.subr.mxu0 0.0
    %112 = vmatpush1.msra.mxu0 0.0
    %113 = vmatprep.subr.mxu0 0.0
    %114 = vmatpush1.msra.mxu0 0.0
    %115 = vmatprep.subr.mxu0 0.0
    %116 = vmatpush1.msra.mxu0 0.0
    %117 = vmatprep.subr.mxu0 0.0
    %118 = vmatpush1.msra.mxu0 0.0
    %119 = vmatprep.mubr.f32.mxu0 0.0
    %120 = vmatmul.mubr.f32.gmra.mrb[0].mxu0 %v53
    %v121 = vpop.f32.mrb[0].mxu0
    %v122 = vadd.f32 %v50, %v121
    %v123 = vpop.f32.mrb[0].mxu0
    %124 = vdwg.mxu0
    %v125 = vmax.f32 %v122, 0.0
    %v126 = vld [vmem:[%s2] sm:$0xff]
    %v127 = vld [vmem:[%s2 + $0x8] sm:$0xff]
    %v128 = vld [vmem:[%s2 + $0x10] sm:$0xff]
    %v129 = vld [vmem:[%s2 + $0x18] sm:$0xff]
    %v130 = vld [vmem:[%s2 + $0x20] sm:$0xff]
    %v131 = vld [vmem:[%s2 + $0x28] sm:$0xff]
    %v132 = vld [vmem:[%s2 + $0x30] sm:$0xff]
    %v133 = vld [vmem:[%s2 + $0x38] sm:$0xff]
    %v134 = vld [vmem:[%s2 + $0x40] sm:$0xff]
    %v135 = vld [vmem:[%s2 + $0x48] sm:$0xff]
    %v136 = vld [vmem:[%s2 + $0x50] sm:$0xff]
    %v137 = vld [vmem:[%s2 + $0x58] sm:$0xff]
    %v138 = vld [vmem:[%s2 + $0x60] sm:$0xff]
    %v139 = vld [vmem:[%s2 + $0x68] sm:$0xff]
    %v140 = vld [vmem:[%s2 + $0x70] sm:$0xff]
    %v141 = vld [vmem:[%s2 + $0x78] sm:$0xff]
    %v142 = vlaneseq
    %v143 = vshrl.u32 %v142, 7
    %v144 = vsub.s32 1, %v143
    %v145 = vrot.slane %v40, %v144
    %146 = vmatprep.subr.mxu0 0.0
    %147 = vmatpush1.msra.mxu0 %v126
    %148 = vmatprep.subr.mxu0 0.0
    %149 = vmatpush1.msra.mxu0 %v127
    %150 = vmatprep.subr.mxu0 0.0
    %151 = vmatpush1.msra.mxu0 %v128
    %152 = vmatprep.subr.mxu0 0.0
    %153 = vmatpush1.msra.mxu0 %v129
    %154 = vmatprep.subr.mxu0 0.0
    %155 = vmatpush1.msra.mxu0 %v130
    %156 = vmatprep.subr.mxu0 0.0
    %157 = vmatpush1.msra.mxu0 %v131
    %158 = vmatprep.subr.mxu0 0.0
    %159 = vmatpush1.msra.mxu0 %v132
    %160 = vmatprep.subr.mxu0 0.0
    %161 = vmatpush1.msra.mxu0 %v133
    %162 = vmatprep.subr.mxu0 0.0
    %163 = vmatpush1.msra.mxu0 %v134
    %164 = vmatprep.subr.mxu0 0.0
    %165 = vmatpush1.msra.mxu0 %v135
    %166 = vmatprep.subr.mxu0 0.0
    %167 = vmatpush1.msra.mxu0 %v136
    %168 = vmatprep.subr.mxu0 0.0
    %169 = vmatpush1.msra.mxu0 %v137
    %170 = vmatprep.subr.mxu0 0.0
    %171 = vmatpush1.msra.mxu0 %v138
    %172 = vmatprep.subr.mxu0 0.0
    %173 = vmatpush1.msra.mxu0 %v139
    %174 = vmatprep.subr.mxu0 0.0
    %175 = vmatpush1.msra.mxu0 %v140
    %176 = vmatprep.subr.mxu0 0.0
    %177 = vmatpush1.msra.mxu0 %v141
    %178 = vmatprep.subr.mxu0 0.0
    %179 = vmatpush1.msra.mxu0 0.0
    %180 = vmatprep.subr.mxu0 0.0
    %181 = vmatpush1.msra.mxu0 0.0
    %182 = vmatprep.subr.mxu0 0.0
    %183 = vmatpush1.msra.mxu0 0.0
    %184 = vmatprep.subr.mxu0 0.0
    %185 = vmatpush1.msra.mxu0 0.0
    %186 = vmatprep.subr.mxu0 0.0
    %187 = vmatpush1.msra.mxu0 0.0
    %188 = vmatprep.subr.mxu0 0.0
    %189 = vmatpush1.msra.mxu0 0.0
    %190 = vmatprep.subr.mxu0 0.0
    %191 = vmatpush1.msra.mxu0 0.0
    %192 = vmatprep.subr.mxu0 0.0
    %193 = vmatpush1.msra.mxu0 0.0
    %194 = vmatprep.subr.mxu0 0.0
    %195 = vmatpush1.msra.mxu0 0.0
    %196 = vmatprep.subr.mxu0 0.0
    %197 = vmatpush1.msra.mxu0 0.0
    %198 = vmatprep.subr.mxu0 0.0
    %199 = vmatpush1.msra.mxu0 0.0
    %200 = vmatprep.subr.mxu0 0.0
    %201 = vmatpush1.msra.mxu0 0.0
    %202 = vmatprep.subr.mxu0 0.0
    %203 = vmatpush1.msra.mxu0 0.0
    %204 = vmatprep.subr.mxu0 0.0
    %205 = vmatpush1.msra.mxu0 0.0
    %206 = vmatprep.subr.mxu0 0.0
    %207 = vmatpush1.msra.mxu0 0.0
    %208 = vmatprep.subr.mxu0 0.0
    %209 = vmatpush1.msra.mxu0 0.0
    %210 = vmatprep.mubr.f32.mxu0 0.0
    %211 = vmatmul.mubr.f32.gmra.mrb[0].mxu0 %v125
    %v212 = vpop.f32.mrb[0].mxu0
    %v213 = vadd.f32 %v145, %v212
    %v214 = vpop.f32.mrb[0].mxu0
    %215 = vdwg.mxu0
    %v216 = vmax.f32 %v213, 0.0
    %v217 = vld [vmem:[%s3] sm:$0xff]
    %v218 = vld [vmem:[%s3 + $0x8] sm:$0xff]
    %v219 = vld [vmem:[%s3 + $0x10] sm:$0xff]
    %v220 = vld [vmem:[%s3 + $0x18] sm:$0xff]
    %v221 = vld [vmem:[%s3 + $0x20] sm:$0xff]
    %v222 = vld [vmem:[%s3 + $0x28] sm:$0xff]
    %v223 = vld [vmem:[%s3 + $0x30] sm:$0xff]
    %v224 = vld [vmem:[%s3 + $0x38] sm:$0xff]
    %v225 = vld [vmem:[%s3 + $0x40] sm:$0xff]
    %v226 = vld [vmem:[%s3 + $0x48] sm:$0xff]
    %v227 = vld [vmem:[%s3 + $0x50] sm:$0xff]
    %v228 = vld [vmem:[%s3 + $0x58] sm:$0xff]
    %v229 = vld [vmem:[%s3 + $0x60] sm:$0xff]
    %v230 = vld [vmem:[%s3 + $0x68] sm:$0xff]
    %v231 = vld [vmem:[%s3 + $0x70] sm:$0xff]
    %v232 = vld [vmem:[%s3 + $0x78] sm:$0xff]
    %v233 = vlaneseq
    %v234 = vshrl.u32 %v233, 7
    %v235 = vsub.s32 2, %v234
    %v236 = vrot.slane %v40, %v235
    %237 = vmatprep.subr.mxu0 0.0
    %238 = vmatpush1.msra.mxu0 %v217
    %239 = vmatprep.subr.mxu0 0.0
    %240 = vmatpush1.msra.mxu0 %v218
    %241 = vmatprep.subr.mxu0 0.0
    %242 = vmatpush1.msra.mxu0 %v219
    %243 = vmatprep.subr.mxu0 0.0
    %244 = vmatpush1.msra.mxu0 %v220
    %245 = vmatprep.subr.mxu0 0.0
    %246 = vmatpush1.msra.mxu0 %v221
    %247 = vmatprep.subr.mxu0 0.0
    %248 = vmatpush1.msra.mxu0 %v222
    %249 = vmatprep.subr.mxu0 0.0
    %250 = vmatpush1.msra.mxu0 %v223
    %251 = vmatprep.subr.mxu0 0.0
    %252 = vmatpush1.msra.mxu0 %v224
    %253 = vmatprep.subr.mxu0 0.0
    %254 = vmatpush1.msra.mxu0 %v225
    %255 = vmatprep.subr.mxu0 0.0
    %256 = vmatpush1.msra.mxu0 %v226
    %257 = vmatprep.subr.mxu0 0.0
    %258 = vmatpush1.msra.mxu0 %v227
    %259 = vmatprep.subr.mxu0 0.0
    %260 = vmatpush1.msra.mxu0 %v228
    %261 = vmatprep.subr.mxu0 0.0
    %262 = vmatpush1.msra.mxu0 %v229
    %263 = vmatprep.subr.mxu0 0.0
    %264 = vmatpush1.msra.mxu0 %v230
    %265 = vmatprep.subr.mxu0 0.0
    %266 = vmatpush1.msra.mxu0 %v231
    %267 = vmatprep.subr.mxu0 0.0
    %268 = vmatpush1.msra.mxu0 %v232
    %269 = vmatprep.subr.mxu0 0.0
    %270 = vmatpush1.msra.mxu0 0.0
    %271 = vmatprep.subr.mxu0 0.0
    %272 = vmatpush1.msra.mxu0 0.0
    %273 = vmatprep.subr.mxu0 0.0
    %274 = vmatpush1.msra.mxu0 0.0
    %275 = vmatprep.subr.mxu0 0.0
    %276 = vmatpush1.msra.mxu0 0.0
    %277 = vmatprep.subr.mxu0 0.0
    %278 = vmatpush1.msra.mxu0 0.0
    %279 = vmatprep.subr.mxu0 0.0
    %280 = vmatpush1.msra.mxu0 0.0
    %281 = vmatprep.subr.mxu0 0.0
    %282 = vmatpush1.msra.mxu0 0.0
    %283 = vmatprep.subr.mxu0 0.0
    %284 = vmatpush1.msra.mxu0 0.0
    %285 = vmatprep.subr.mxu0 0.0
    %286 = vmatpush1.msra.mxu0 0.0
    %287 = vmatprep.subr.mxu0 0.0
    %288 = vmatpush1.msra.mxu0 0.0
    %289 = vmatprep.subr.mxu0 0.0
    %290 = vmatpush1.msra.mxu0 0.0
    %291 = vmatprep.subr.mxu0 0.0
    %292 = vmatpush1.msra.mxu0 0.0
    %293 = vmatprep.subr.mxu0 0.0
    %294 = vmatpush1.msra.mxu0 0.0
    %295 = vmatprep.subr.mxu0 0.0
    %296 = vmatpush1.msra.mxu0 0.0
    %297 = vmatprep.subr.mxu0 0.0
    %298 = vmatpush1.msra.mxu0 0.0
    %299 = vmatprep.subr.mxu0 0.0
    %300 = vmatpush1.msra.mxu0 0.0
    %301 = vmatprep.mubr.f32.mxu0 0.0
    %302 = vmatmul.mubr.f32.gmra.mrb[0].mxu0 %v216
    %v303 = vpop.f32.mrb[0].mxu0
    %v304 = vadd.f32 %v236, %v303
    %v305 = vpop.f32.mrb[0].mxu0
    %306 = vdwg.mxu0
    %v307 = vmax.f32 %v304, 0.0
    %v308 = vld [vmem:[%s4] sm:$0xff]
    %v309 = vld [vmem:[%s4 + $0x8] sm:$0xff]
    %v310 = vld [vmem:[%s4 + $0x10] sm:$0xff]
    %v311 = vld [vmem:[%s4 + $0x18] sm:$0xff]
    %v312 = vld [vmem:[%s4 + $0x20] sm:$0xff]
    %v313 = vld [vmem:[%s4 + $0x28] sm:$0xff]
    %v314 = vld [vmem:[%s4 + $0x30] sm:$0xff]
    %v315 = vld [vmem:[%s4 + $0x38] sm:$0xff]
    %v316 = vld [vmem:[%s4 + $0x40] sm:$0xff]
    %v317 = vld [vmem:[%s4 + $0x48] sm:$0xff]
    %v318 = vld [vmem:[%s4 + $0x50] sm:$0xff]
    %v319 = vld [vmem:[%s4 + $0x58] sm:$0xff]
    %v320 = vld [vmem:[%s4 + $0x60] sm:$0xff]
    %v321 = vld [vmem:[%s4 + $0x68] sm:$0xff]
    %v322 = vld [vmem:[%s4 + $0x70] sm:$0xff]
    %v323 = vld [vmem:[%s4 + $0x78] sm:$0xff]
    %v324 = vld [vmem:[%s6] sm:$0x1]
    %v326 = vlaneseq
    %v327 = vshrl.u32 %v326, 7
    %v328 = vsub.s32 0, %v327
    %v329 = vrot.slane %v324, %v328
    %331 = vmatprep.subr.mxu0 0.0
    %332 = vmatpush1.msra.mxu0 %v308
    %333 = vmatprep.subr.mxu0 0.0
    %334 = vmatpush1.msra.mxu0 %v309
    %335 = vmatprep.subr.mxu0 0.0
    %336 = vmatpush1.msra.mxu0 %v310
    %337 = vmatprep.subr.mxu0 0.0
    %338 = vmatpush1.msra.mxu0 %v311
    %339 = vmatprep.subr.mxu0 0.0
    %340 = vmatpush1.msra.mxu0 %v312
    %341 = vmatprep.subr.mxu0 0.0
    %342 = vmatpush1.msra.mxu0 %v313
    %343 = vmatprep.subr.mxu0 0.0
    %344 = vmatpush1.msra.mxu0 %v314
    %345 = vmatprep.subr.mxu0 0.0
    %346 = vmatpush1.msra.mxu0 %v315
    %347 = vmatprep.subr.mxu0 0.0
    %348 = vmatpush1.msra.mxu0 %v316
    %349 = vmatprep.subr.mxu0 0.0
    %350 = vmatpush1.msra.mxu0 %v317
    %351 = vmatprep.subr.mxu0 0.0
    %352 = vmatpush1.msra.mxu0 %v318
    %353 = vmatprep.subr.mxu0 0.0
    %354 = vmatpush1.msra.mxu0 %v319
    %355 = vmatprep.subr.mxu0 0.0
    %356 = vmatpush1.msra.mxu0 %v320
    %357 = vmatprep.subr.mxu0 0.0
    %358 = vmatpush1.msra.mxu0 %v321
    %359 = vmatprep.subr.mxu0 0.0
    %360 = vmatpush1.msra.mxu0 %v322
    %361 = vmatprep.subr.mxu0 0.0
    %362 = vmatpush1.msra.mxu0 %v323
    %363 = vmatprep.subr.mxu0 0.0
    %364 = vmatpush1.msra.mxu0 0.0
    %365 = vmatprep.subr.mxu0 0.0
    %366 = vmatpush1.msra.mxu0 0.0
    %367 = vmatprep.subr.mxu0 0.0
    %368 = vmatpush1.msra.mxu0 0.0
    %369 = vmatprep.subr.mxu0 0.0
    %370 = vmatpush1.msra.mxu0 0.0
    %371 = vmatprep.subr.mxu0 0.0
    %372 = vmatpush1.msra.mxu0 0.0
    %373 = vmatprep.subr.mxu0 0.0
    %374 = vmatpush1.msra.mxu0 0.0
    %375 = vmatprep.subr.mxu0 0.0
    %376 = vmatpush1.msra.mxu0 0.0
    %377 = vmatprep.subr.mxu0 0.0
    %378 = vmatpush1.msra.mxu0 0.0
    %379 = vmatprep.subr.mxu0 0.0
    %380 = vmatpush1.msra.mxu0 0.0
    %381 = vmatprep.subr.mxu0 0.0
    %382 = vmatpush1.msra.mxu0 0.0
    %383 = vmatprep.subr.mxu0 0.0
    %384 = vmatpush1.msra.mxu0 0.0
    %385 = vmatprep.subr.mxu0 0.0
    %386 = vmatpush1.msra.mxu0 0.0
    %387 = vmatprep.subr.mxu0 0.0
    %388 = vmatpush1.msra.mxu0 0.0
    %389 = vmatprep.subr.mxu0 0.0
    %390 = vmatpush1.msra.mxu0 0.0
    %391 = vmatprep.subr.mxu0 0.0
    %392 = vmatpush1.msra.mxu0 0.0
    %393 = vmatprep.subr.mxu0 0.0
    %394 = vmatpush1.msra.mxu0 0.0
    %395 = vmatprep.mubr.f32.mxu0 0.0
    %396 = vmatmul.mubr.f32.gmra.mrb[0].mxu0 %v307
    %v397 = vpop.f32.mrb[0].mxu0
    %v398 = vadd.f32 %v329, %v397
    %v399 = vpop.f32.mrb[0].mxu0
    %400 = vdwg.mxu0
    %vm401 = vcmask 64512
    %402 = vst.msk [vmem:[%s7] sm:$0xff] %vm401, %v398
    // Predicated region
    $region34: #{mlp_planner_forward.1} parent=1 // pred_check
      _
    $region35: #{mlp_planner_forward.1} parent=1 // pred_check_branch
      %404 = sbr.rel (0) target = $region37
    $region36: #{mlp_planner_forward.1} parent=1 // pred_region
      _
    $region37: #{mlp_planner_forward.1} parent=1 // pred_fallthru
      _
    // Predicated region
    $region38: #{mlp_planner_forward.1} parent=1 // pred_check
      _
    $region39: #{mlp_planner_forward.1} parent=1 // pred_check_branch
      %406 = sbr.rel (0) target = $region41
    $region40: #{mlp_planner_forward.1} parent=1 // pred_region
      _
    $region41: #{mlp_planner_forward.1} parent=1 // pred_fallthru
      _
    %407 = vsyncpa [#allocation3], 1

</llo_original>
